<compile_context>
chip_gen: v5e
topology: v5e:2x2
jax: 0.10.0
libtpu: 0.0.40
codegen_flags: <defaults>
</compile_context>

<pallas_src>
import jax
import jax.numpy as jnp
from jax.experimental import pallas as pl
from jax.experimental.pallas import tpu as pltpu


def _cpam_dec_kernel(x_ref, y_ref, yt_ref, wq_ref, bq_ref, wkt_ref, bk_ref,
                     wv_ref, bv_ref, scale_ref, o_ref):
    """One (batch, HW-tile) grid point.

    x_ref   : (1, C, tHW)  f32   native-layout input tile (HW on the lane axis)
    y_ref   : (1, K, C)    cd    gathering centers
    yt_ref  : (1, C, K)    cd    gathering centers, transposed (for value proj)
    wq_ref  : (C4, C) cd ; bq_ref: (C4, 1) f32     conv_query (1x1 conv)
    wkt_ref : (C, C4) cd ; bk_ref: (1, C4) f32     conv_key   (Linear, W^T)
    wv_ref  : (C, C)  cd ; bv_ref: (C, 1)  f32     conv_value (Linear)
    scale_ref : (1,) f32 in SMEM
    o_ref   : (1, C, tHW)  f32
    """
    cd = wq_ref.dtype            # MXU input dtype (bf16 fast path or f32)

    x = x_ref[0]                 # (C, tHW)  kept f32 for the exact residual
    y = y_ref[0]                 # (K, C)
    yt = yt_ref[0]               # (C, K)

    # proj_query^T : (C4, tHW)   (1x1 conv == channel matmul; HW stays lanes)
    qT = jnp.dot(wq_ref[...], x.astype(cd),
                 preferred_element_type=jnp.float32) + bq_ref[...]
    # proj_key : (K, C4)
    k = jnp.dot(y, wkt_ref[...],
                preferred_element_type=jnp.float32) + bk_ref[...]
    # proj_value^T : (C, K) — issued before the softmax so its MXU push can
    # overlap the VPU/EUP softmax work.
    vT = jnp.dot(wv_ref[...], yt,
                 preferred_element_type=jnp.float32) + bv_ref[...]

    # energy^T : (K, tHW)
    eT = jnp.dot(k.astype(cd), qT.astype(cd),
                 preferred_element_type=jnp.float32)

    # softmax over K (sublane axis), numerically stabilized — matches torch.
    e_max = jnp.max(eT, axis=0, keepdims=True)            # (1, tHW)
    p = jnp.exp(eT - e_max)                                # (K, tHW)
    attnT = p * pl.reciprocal(jnp.sum(p, axis=0, keepdims=True), approx=False)

    # out^T : (C, tHW) = proj_value^T @ attention^T
    out = jnp.dot(vT.astype(cd), attnT.astype(cd),
                  preferred_element_type=jnp.float32)

    o_ref[0] = scale_ref[0] * out + x


def _pick_hw_tile(hw, target):
    """Largest divisor of hw that is a multiple of 128 and <= target, else hw."""
    if hw <= target:
        return hw
    start = target - (target % 128)
    for cand in range(start, 0, -128):
        if hw % cand == 0:
            return cand
    return hw  # no aligned divisor: fall back to a single full-extent block


def cpam_dec(x, y, params, *, compute_dtype=jnp.bfloat16, hw_tile_target=2048):
    """x: (N, C, W, H) NCHW float32;  y: (N, K, M) with M == C."""
    N, C, W, H = x.shape
    _, K, M = y.shape
    assert M == C, "gathering-center feature dim must equal in_channels"
    C4 = C // 4
    HW = W * H

    tHW = _pick_hw_tile(HW, hw_tile_target)
    n_hw = HW // tHW

    # Native layout: pure reshape, no data movement (vs. old NCHW->NHWC passes).
    x_flat = x.reshape(N, C, HW).astype(jnp.float32)
    y_c = y.astype(compute_dtype)                       # (N, K, C)
    y_t = jnp.transpose(y_c, (0, 2, 1))                 # (N, C, K)  (tiny)

    # Weights pre-oriented at trace time -> no per-iteration transposes in-kernel.
    wq = params["wq"].astype(compute_dtype)             # (C4, C)
    wk_t = params["wk"].T.astype(compute_dtype)         # (C, C4)
    wv = params["wv"].astype(compute_dtype)             # (C, C)
    bq = params["bq"].reshape(C4, 1).astype(jnp.float32)
    bk = params["bk"].reshape(1, C4).astype(jnp.float32)
    bv = params["bv"].reshape(C, 1).astype(jnp.float32)
    scale = params["scale"].reshape(1).astype(jnp.float32)

    itemsize = jnp.dtype(compute_dtype).itemsize
    flops = 2 * N * (HW * (C4 * C + K * C4 + K * C) + K * C * (C4 + C))
    transcendentals = N * HW * K
    bytes_accessed = (2 * N * HW * C * 4                      # x in + out
                      + 2 * N * K * C * itemsize              # y + y^T
                      + (2 * C4 * C + C * C) * itemsize       # weights
                      + (2 * C4 + C + 1) * 4)                 # biases + scale
    cost = pl.CostEstimate(flops=flops, transcendentals=transcendentals,
                           bytes_accessed=bytes_accessed)

    grid_spec = pltpu.PrefetchScalarGridSpec(
        num_scalar_prefetch=0,
        grid=(N, n_hw),
        in_specs=[
            pl.BlockSpec((1, C, tHW), lambda b, h: (b, 0, h)),   # x tile
            pl.BlockSpec((1, K, C), lambda b, h: (b, 0, 0)),     # y   (resident per b)
            pl.BlockSpec((1, C, K), lambda b, h: (b, 0, 0)),     # y^T (resident per b)
            pl.BlockSpec((C4, C), lambda b, h: (0, 0)),          # wq
            pl.BlockSpec((C4, 1), lambda b, h: (0, 0)),          # bq
            pl.BlockSpec((C, C4), lambda b, h: (0, 0)),          # wk^T
            pl.BlockSpec((1, C4), lambda b, h: (0, 0)),          # bk
            pl.BlockSpec((C, C), lambda b, h: (0, 0)),           # wv
            pl.BlockSpec((C, 1), lambda b, h: (0, 0)),           # bv
            pl.BlockSpec(memory_space=pltpu.MemorySpace.SMEM),   # scale (scalar path)
        ],
        out_specs=pl.BlockSpec((1, C, tHW), lambda b, h: (b, 0, h)),
    )

    out_flat = pl.pallas_call(
        _cpam_dec_kernel,
        out_shape=jax.ShapeDtypeStruct((N, C, HW), jnp.float32),
        grid_spec=grid_spec,
        compiler_params=pltpu.CompilerParams(
            dimension_semantics=("parallel", "parallel")),
        cost_estimate=cost,
    )(x_flat, y_c, y_t, wq, bq, wk_t, bk, wv, bv, scale)

    return out_flat.reshape(N, C, W, H)   # free reshape


def cpam_dec_reference(x, y, params):
    """Pure-JAX f32 reference mirroring the PyTorch forward, for verification."""
    N, C, W, H = x.shape
    HW = W * H
    wq, bq = params["wq"], params["bq"]
    wk, bk = params["wk"], params["bk"]
    wv, bv = params["wv"], params["bv"]
    scale = params["scale"][0]

    q = jnp.einsum("nchw,oc->nohw", x, wq) + bq[None, :, None, None]   # (N,C4,W,H)
    proj_query = jnp.transpose(q.reshape(N, -1, HW), (0, 2, 1))        # (N,HW,C4)
    proj_key = jnp.transpose(jnp.einsum("nkm,om->nko", y, wk) + bk, (0, 2, 1))
    energy = jnp.einsum("nqc,nck->nqk", proj_query, proj_key)          # (N,HW,K)
    attention = jax.nn.softmax(energy, axis=-1)
    proj_value = jnp.transpose(jnp.einsum("nkm,cm->nkc", y, wv) + bv, (0, 2, 1))
    out = jnp.einsum("nck,nqk->ncq", proj_value, attention)            # (N,C,HW)
    out = out.reshape(N, C, W, H)
    return scale * out + x


if __name__ == "__main__":
    def make_inputs(N, C, W, H, K, seed=0):
        C4 = C // 4
        key = jax.random.PRNGKey(seed)
        kx, ky, k1, k2, k3, k4, k5, k6, k7 = jax.random.split(key, 9)
        x = jax.random.normal(kx, (N, C, W, H), dtype=jnp.float32)
        y = jax.random.normal(ky, (N, K, C), dtype=jnp.float32)
        # NOTE: nn.Parameter(torch.zeros(1)) would make out == x trivially; use
        # a nonzero deterministic scale so the attention path is exercised.
        params = {
            "wq": jax.random.normal(k1, (C4, C), dtype=jnp.float32) * 0.1,
            "bq": jax.random.normal(k2, (C4,), dtype=jnp.float32) * 0.1,
            "wk": jax.random.normal(k3, (C4, C), dtype=jnp.float32) * 0.1,
            "bk": jax.random.normal(k4, (C4,), dtype=jnp.float32) * 0.1,
            "wv": jax.random.normal(k5, (C, C), dtype=jnp.float32) * 0.1,
            "bv": jax.random.normal(k6, (C,), dtype=jnp.float32) * 0.1,
            "scale": jax.random.normal(k7, (1,), dtype=jnp.float32) * 0.5,
        }
        return x, y, params

    # 1) exact f32 path, single HW tile.
    x, y, params = make_inputs(2, 16, 8, 8, 8)
    out = jax.block_until_ready(cpam_dec(x, y, params, compute_dtype=jnp.float32))
    ref = cpam_dec_reference(x, y, params)
    assert out.shape == x.shape
    assert jnp.allclose(out, ref, rtol=1e-4, atol=1e-4), (
        f"f32 single-tile max abs diff = {jnp.max(jnp.abs(out - ref))}")

    # 2) exact f32 path, multiple HW tiles (exercises the (N, HW//tHW) grid).
    x, y, params = make_inputs(2, 16, 16, 16, 8)
    out = jax.block_until_ready(
        cpam_dec(x, y, params, compute_dtype=jnp.float32, hw_tile_target=128))
    ref = cpam_dec_reference(x, y, params)
    assert jnp.allclose(out, ref, rtol=1e-4, atol=1e-4), (
        f"f32 tiled max abs diff = {jnp.max(jnp.abs(out - ref))}")

    # 3) bf16 MXU-input fast path (v6e/v7x), compared against f32 reference.
    out_bf = jax.block_until_ready(
        cpam_dec(x, y, params, compute_dtype=jnp.bfloat16, hw_tile_target=128))
    assert jnp.allclose(out_bf, ref, rtol=2e-2, atol=2e-2), (
        f"bf16 tiled max abs diff = {jnp.max(jnp.abs(out_bf - ref))}")

    print("KERNEL_OK")
</pallas_src>

<mosaic_0001>
module attributes {stable_mosaic.version = 11 : i64} {
  func.func @_cpam_dec_kernel(%arg0: i32, %arg1: i32, %arg2: memref<1x16x64xf32, #tpu.memory_space<vmem>>, %arg3: memref<1x8x16xf32, #tpu.memory_space<vmem>>, %arg4: memref<1x16x8xf32, #tpu.memory_space<vmem>>, %arg5: memref<4x16xf32, #tpu.memory_space<vmem>>, %arg6: memref<4x1xf32, #tpu.memory_space<vmem>>, %arg7: memref<16x4xf32, #tpu.memory_space<vmem>>, %arg8: memref<1x4xf32, #tpu.memory_space<vmem>>, %arg9: memref<16x16xf32, #tpu.memory_space<vmem>>, %arg10: memref<16x1xf32, #tpu.memory_space<vmem>>, %arg11: memref<1xf32, #tpu.memory_space<smem>>, %arg12: memref<1x16x64xf32, #tpu.memory_space<vmem>>) attributes {dimension_semantics = [#tpu.dimension_semantics<parallel>, #tpu.dimension_semantics<parallel>], iteration_bounds = array<i64: 2, 1>, scalar_prefetch = 0 : i64, scratch_operands = 0 : i64, tpu.core_type = #tpu.core_type<tc>, window_params = [{transform_indices = @transform_0, window_bounds = array<i64: 1, 16, 64>}, {transform_indices = @transform_1, window_bounds = array<i64: 1, 8, 16>}, {transform_indices = @transform_2, window_bounds = array<i64: 1, 16, 8>}, {pipeline_mode = #tpu.pipeline_mode<synchronous>, transform_indices = @transform_3, window_bounds = array<i64: 4, 16>}, {pipeline_mode = #tpu.pipeline_mode<synchronous>, transform_indices = @transform_4, window_bounds = array<i64: 4, 1>}, {pipeline_mode = #tpu.pipeline_mode<synchronous>, transform_indices = @transform_5, window_bounds = array<i64: 16, 4>}, {pipeline_mode = #tpu.pipeline_mode<synchronous>, transform_indices = @transform_6, window_bounds = array<i64: 1, 4>}, {pipeline_mode = #tpu.pipeline_mode<synchronous>, transform_indices = @transform_7, window_bounds = array<i64: 16, 16>}, {pipeline_mode = #tpu.pipeline_mode<synchronous>, transform_indices = @transform_8, window_bounds = array<i64: 16, 1>}, {transform_indices = @transform_9, window_bounds = array<i64: 1>}, {transform_indices = @transform_10, window_bounds = array<i64: 1, 16, 64>}]} {
    %c0 = arith.constant 0 : index
    %c0_0 = arith.constant 0 : index
    %c0_1 = arith.constant 0 : index
    %0 = vector.load %arg2[%c0, %c0_0, %c0_1] : memref<1x16x64xf32, #tpu.memory_space<vmem>>, vector<1x16x64xf32>
    %1 = vector.shape_cast %0 : vector<1x16x64xf32> to vector<16x64xf32>
    %c0_2 = arith.constant 0 : index
    %c0_3 = arith.constant 0 : index
    %c0_4 = arith.constant 0 : index
    %2 = vector.load %arg3[%c0_2, %c0_3, %c0_4] : memref<1x8x16xf32, #tpu.memory_space<vmem>>, vector<1x8x16xf32>
    %3 = vector.shape_cast %2 : vector<1x8x16xf32> to vector<8x16xf32>
    %c0_5 = arith.constant 0 : index
    %c0_6 = arith.constant 0 : index
    %c0_7 = arith.constant 0 : index
    %4 = vector.load %arg4[%c0_5, %c0_6, %c0_7] : memref<1x16x8xf32, #tpu.memory_space<vmem>>, vector<1x16x8xf32>
    %5 = vector.shape_cast %4 : vector<1x16x8xf32> to vector<16x8xf32>
    %c0_8 = arith.constant 0 : index
    %c0_9 = arith.constant 0 : index
    %6 = vector.load %arg5[%c0_8, %c0_9] : memref<4x16xf32, #tpu.memory_space<vmem>>, vector<4x16xf32>
    %cst = arith.constant dense<0.000000e+00> : vector<4x64xf32>
    %7 = tpu.matmul %6, %1, %cst {dimension_numbers = #tpu.dot_dimension_numbers<[1], [0], [0], [1], [0, 0, 1, 1], [], []>} : vector<4x16xf32>, vector<16x64xf32>, vector<4x64xf32> -> vector<4x64xf32>
    %c0_10 = arith.constant 0 : index
    %c0_11 = arith.constant 0 : index
    %8 = vector.load %arg6[%c0_10, %c0_11] : memref<4x1xf32, #tpu.memory_space<vmem>>, vector<4x1xf32>
    %9 = vector.broadcast %8 : vector<4x1xf32> to vector<4x64xf32>
    %10 = arith.addf %7, %9 : vector<4x64xf32>
    %c0_12 = arith.constant 0 : index
    %c0_13 = arith.constant 0 : index
    %11 = vector.load %arg7[%c0_12, %c0_13] : memref<16x4xf32, #tpu.memory_space<vmem>>, vector<16x4xf32>
    %cst_14 = arith.constant dense<0.000000e+00> : vector<8x4xf32>
    %12 = tpu.matmul %3, %11, %cst_14 {dimension_numbers = #tpu.dot_dimension_numbers<[1], [0], [0], [1], [0, 0, 1, 1], [], []>} : vector<8x16xf32>, vector<16x4xf32>, vector<8x4xf32> -> vector<8x4xf32>
    %c0_15 = arith.constant 0 : index
    %c0_16 = arith.constant 0 : index
    %13 = vector.load %arg8[%c0_15, %c0_16] : memref<1x4xf32, #tpu.memory_space<vmem>>, vector<1x4xf32>
    %14 = vector.broadcast %13 : vector<1x4xf32> to vector<8x4xf32>
    %15 = arith.addf %12, %14 : vector<8x4xf32>
    %c0_17 = arith.constant 0 : index
    %c0_18 = arith.constant 0 : index
    %16 = vector.load %arg9[%c0_17, %c0_18] : memref<16x16xf32, #tpu.memory_space<vmem>>, vector<16x16xf32>
    %cst_19 = arith.constant dense<0.000000e+00> : vector<16x8xf32>
    %17 = tpu.matmul %16, %5, %cst_19 {dimension_numbers = #tpu.dot_dimension_numbers<[1], [0], [0], [1], [0, 0, 1, 1], [], []>} : vector<16x16xf32>, vector<16x8xf32>, vector<16x8xf32> -> vector<16x8xf32>
    %c0_20 = arith.constant 0 : index
    %c0_21 = arith.constant 0 : index
    %18 = vector.load %arg10[%c0_20, %c0_21] : memref<16x1xf32, #tpu.memory_space<vmem>>, vector<16x1xf32>
    %19 = vector.broadcast %18 : vector<16x1xf32> to vector<16x8xf32>
    %20 = arith.addf %17, %19 : vector<16x8xf32>
    %cst_22 = arith.constant dense<0.000000e+00> : vector<8x64xf32>
    %21 = tpu.matmul %15, %10, %cst_22 {dimension_numbers = #tpu.dot_dimension_numbers<[1], [0], [0], [1], [0, 0, 1, 1], [], []>} : vector<8x4xf32>, vector<4x64xf32>, vector<8x64xf32> -> vector<8x64xf32>
    %cst_23 = arith.constant dense<0xFF800000> : vector<64xf32>
    %22 = vector.multi_reduction <maximumf>, %21, %cst_23 [0] : vector<8x64xf32> to vector<64xf32>
    %23 = vector.shape_cast %22 : vector<64xf32> to vector<1x64xf32>
    %24 = vector.broadcast %23 : vector<1x64xf32> to vector<8x64xf32>
    %25 = arith.subf %21, %24 : vector<8x64xf32>
    %26 = math.exp %25 : vector<8x64xf32>
    %cst_24 = arith.constant dense<0.000000e+00> : vector<64xf32>
    %27 = vector.multi_reduction <add>, %26, %cst_24 [0] : vector<8x64xf32> to vector<64xf32>
    %28 = vector.shape_cast %27 : vector<64xf32> to vector<1x64xf32>
    %29 = tpu.reciprocal %28 : vector<1x64xf32> -> vector<1x64xf32>
    %30 = vector.broadcast %29 : vector<1x64xf32> to vector<8x64xf32>
    %31 = arith.mulf %26, %30 : vector<8x64xf32>
    %cst_25 = arith.constant dense<0.000000e+00> : vector<16x64xf32>
    %32 = tpu.matmul %20, %31, %cst_25 {dimension_numbers = #tpu.dot_dimension_numbers<[1], [0], [0], [1], [0, 0, 1, 1], [], []>} : vector<16x8xf32>, vector<8x64xf32>, vector<16x64xf32> -> vector<16x64xf32>
    %c0_26 = arith.constant 0 : index
    %33 = memref.load %arg11[%c0_26] : memref<1xf32, #tpu.memory_space<smem>>
    %34 = vector.broadcast %33 : f32 to vector<16x64xf32>
    %35 = arith.mulf %34, %32 : vector<16x64xf32>
    %36 = arith.addf %35, %1 : vector<16x64xf32>
    %c0_27 = arith.constant 0 : index
    %c0_28 = arith.constant 0 : index
    %c0_29 = arith.constant 0 : index
    %37 = vector.load %arg12[%c0_27, %c0_28, %c0_29] : memref<1x16x64xf32, #tpu.memory_space<vmem>>, vector<1x16x64xf32>
    %38 = vector.shape_cast %37 : vector<1x16x64xf32> to vector<16x64xf32>
    %39 = vector.shape_cast %36 : vector<16x64xf32> to vector<1x16x64xf32>
    tpu.vector_store %arg12[%c0_27, %c0_28, %c0_29], %39 {strides = array<i32>} : memref<1x16x64xf32, #tpu.memory_space<vmem>>, vector<1x16x64xf32>,
    return
  }
  func.func @transform_0(%arg0: i32, %arg1: i32) -> (i32, i32, i32) {
    %c0_i32 = arith.constant 0 : i32
    %c0_i32_0 = arith.constant 0 : i32
    return %arg0, %c0_i32, %arg1 : i32, i32, i32
  }
  func.func @transform_1(%arg0: i32, %arg1: i32) -> (i32, i32, i32) {
    %c0_i32 = arith.constant 0 : i32
    %c0_i32_0 = arith.constant 0 : i32
    %c0_i32_1 = arith.constant 0 : i32
    return %arg0, %c0_i32, %c0_i32_0 : i32, i32, i32
  }
  func.func @transform_2(%arg0: i32, %arg1: i32) -> (i32, i32, i32) {
    %c0_i32 = arith.constant 0 : i32
    %c0_i32_0 = arith.constant 0 : i32
    %c0_i32_1 = arith.constant 0 : i32
    return %arg0, %c0_i32, %c0_i32_0 : i32, i32, i32
  }
  func.func @transform_3(%arg0: i32, %arg1: i32) -> (i32, i32) {
    %c0_i32 = arith.constant 0 : i32
    %c0_i32_0 = arith.constant 0 : i32
    %c0_i32_1 = arith.constant 0 : i32
    return %c0_i32, %c0_i32_0 : i32, i32
  }
  func.func @transform_4(%arg0: i32, %arg1: i32) -> (i32, i32) {
    %c0_i32 = arith.constant 0 : i32
    %c0_i32_0 = arith.constant 0 : i32
    %c0_i32_1 = arith.constant 0 : i32
    return %c0_i32, %c0_i32_0 : i32, i32
  }
  func.func @transform_5(%arg0: i32, %arg1: i32) -> (i32, i32) {
    %c0_i32 = arith.constant 0 : i32
    %c0_i32_0 = arith.constant 0 : i32
    %c0_i32_1 = arith.constant 0 : i32
    return %c0_i32, %c0_i32_0 : i32, i32
  }
  func.func @transform_6(%arg0: i32, %arg1: i32) -> (i32, i32) {
    %c0_i32 = arith.constant 0 : i32
    %c0_i32_0 = arith.constant 0 : i32
    %c0_i32_1 = arith.constant 0 : i32
    return %c0_i32, %c0_i32_0 : i32, i32
  }
  func.func @transform_7(%arg0: i32, %arg1: i32) -> (i32, i32) {
    %c0_i32 = arith.constant 0 : i32
    %c0_i32_0 = arith.constant 0 : i32
    %c0_i32_1 = arith.constant 0 : i32
    return %c0_i32, %c0_i32_0 : i32, i32
  }
  func.func @transform_8(%arg0: i32, %arg1: i32) -> (i32, i32) {
    %c0_i32 = arith.constant 0 : i32
    %c0_i32_0 = arith.constant 0 : i32
    %c0_i32_1 = arith.constant 0 : i32
    return %c0_i32, %c0_i32_0 : i32, i32
  }
  func.func @transform_9(%arg0: i32, %arg1: i32) -> i32 {
    %c0_i32 = arith.constant 0 : i32
    %c0_i32_0 = arith.constant 0 : i32
    return %c0_i32 : i32
  }
  func.func @transform_10(%arg0: i32, %arg1: i32) -> (i32, i32, i32) {
    %c0_i32 = arith.constant 0 : i32
    %c0_i32_0 = arith.constant 0 : i32
    return %arg0, %c0_i32, %arg1 : i32, i32, i32
  }
}

</mosaic_0001>

<llo_original>
// kernel: tpu_custom_call.1
$region0: #{tpu_custom_call.1}
  #allocation0 [shape = 'u32[]', space=smem, size = 0x4, offset = 0x4, fixed_abs, tag = 'smem constant byte address 0x4 - core index']
  #allocation1 [shape = 'u32[72,128]{1,0:T(1,128)}', space=vmem, size = 0x9000, scoped, tag = 'internal scratch']
  #allocation2 [shape = 'f32[1]{0:T(128)S(6)}', space=smem, size = 0x200, scoped, tag = 'scoped memory for tpu_custom_call.1']
  %s0 = inlined_call_operand.vmem [shape: f32[2,16,64], index: 0, kind: input, shape index: {}]
  %s1 = inlined_call_operand.vmem [shape: f32[2,8,16], index: 1, kind: input, shape index: {}]
  %s2 = inlined_call_operand.vmem [shape: f32[2,16,8], index: 2, kind: input, shape index: {}]
  %s3 = inlined_call_operand.vmem [shape: f32[4,16], index: 3, kind: input, shape index: {}]
  %s4 = inlined_call_operand.vmem [shape: f32[4,1], index: 4, kind: input, shape index: {}]
  %s5 = inlined_call_operand.vmem [shape: f32[16,4], index: 5, kind: input, shape index: {}]
  %s6 = inlined_call_operand.vmem [shape: f32[1,4], index: 6, kind: input, shape index: {}]
  %s7 = inlined_call_operand.vmem [shape: f32[16,16], index: 7, kind: input, shape index: {}]
  %s8 = inlined_call_operand.vmem [shape: f32[16,1], index: 8, kind: input, shape index: {}]
  %s9 = inlined_call_operand.<no memory space> [shape: f32[1], index: 9, kind: input, shape index: {}]
  %s10 = inlined_call_operand.hbm [shape: f32[2,16,64], index: 10, kind: output, shape index: {}]
  %s11 = sld [smem:[#allocation0]]
  $region73: #{tpu_custom_call.1} parent=0
    _
  %s13 = ssub.s32 1, %s11
  %s14 = scalar_select 0, %s13, %s11
  %15 = sst [smem:[#allocation2]] %s9
  $region1: #{tpu_custom_call.1} parent=0
    #allocation3 [shape = 'u8[16384]{0}', space=vmem, size = 0x4000, scoped, tag = 'output window, operand 0']
    #allocation4 [shape = 's32[2]{0}', space=sflag, size = 0x8, scoped, tag = 'scoped memory for tpu_custom_call.1']
    %16 = vsyncpa [#allocation4], 0
    %s17 = scalar_lea.sflag [#allocation4], 1
    %18 = vsyncpa %s17, 0
    loop: start=0, step=1, limit=4
    $region2: #{tpu_custom_call.1} parent=1 // loop_pre_header
      _
    $region3: #{tpu_custom_call.1} parent=1 // loop_header
      %s20 = sphi 0, %s24
      %p21 = scmp.ge.s32.totalorder %s20, 4
      %s27 = sphi 0, %s39
      %s28 = sphi 0, %s35
      %s29 = sphi 0, %s27
      %s30 = sphi 0, %s28
      %s31 = sphi 0, %s29
      %s32 = sphi 0, %s30
      %s44 = sphi 0, %s46
      %s47 = sphi 0, %s44
      %s48 = sphi 0, %s47
      %s64 = sphi 0, %s48
      %s70 = sphi 0, %s72
      %s73 = sphi 0, %s70
      %s74 = sphi 0, %s73
      %s90 = sphi 0, %s74
      %s96 = sphi 0, %s98
      %s99 = sphi 0, %s96
      %s100 = sphi 0, %s99
      %s116 = sphi 0, %s100
      %s120 = sphi 0, %s120
      %s122 = sphi 0, %s120
      %s123 = sphi 0, %s122
      %s137 = sphi 0, %s123
      %s141 = sphi 0, %s141
      %s143 = sphi 0, %s141
      %s144 = sphi 0, %s143
      %s158 = sphi 0, %s144
      %s162 = sphi 0, %s162
      %s164 = sphi 0, %s162
      %s165 = sphi 0, %s164
      %s179 = sphi 0, %s165
      %s183 = sphi 0, %s183
      %s185 = sphi 0, %s183
      %s186 = sphi 0, %s185
      %s200 = sphi 0, %s186
      %s204 = sphi 0, %s204
      %s206 = sphi 0, %s204
      %s207 = sphi 0, %s206
      %s221 = sphi 0, %s207
      %s225 = sphi 0, %s225
      %s227 = sphi 0, %s225
      %s228 = sphi 0, %s227
      %s242 = sphi 0, %s228
      %s246 = sphi 0, %s246
      %s248 = sphi 0, %s246
      %s249 = sphi 0, %s248
      %s263 = sphi 0, %s249
      %s271 = sphi 0, %s273
      %s274 = sphi 0, %s271
      %s275 = sphi 0, %s274
      %s291 = sphi 0, %s275
    $region4: #{tpu_custom_call.1} parent=1 // loop_header_branch
      %23 = sbr.rel (%p21) target = $region8
    $region5: #{tpu_custom_call.1} parent=1 // loop_body
      %s25 = ssub.s32 %s20, 1
      %s26 = ssub.s32 %s20, 2
      %s33 = sadd.s32 1, %s28
      %p34 = scmp.ge.s32.totalorder %s33, 1
      %s35 = scalar_select %p34, 0, %s33
      %s36 = sadd.s32 1, %s27
      %s37 = scalar_select %p34, %s36, %s27
      %p38 = scmp.ge.s32.totalorder %s37, 2
      %s39 = scalar_select %p38, 0, %s37
      %s40 = ssub.s32 %s27, %s39
      %s41 = ssub.s32 %s28, %s35
      %s42 = sor.u32 %s40, %s41
      %p43 = scmp.eq.s32.totalorder %s42, 0
      %s45 = sadd.s32 %s44, 1
      %s46 = scalar_select %p43, %s44, %s45
      %p49 = pneg %p43
      %p50 = scmp.eq.s32.totalorder %s20, 1
      %p51 = por %p49, %p50
      %p52 = scmp.ne.s32.totalorder %s44, %s47
      %p53 = scmp.eq.s32.totalorder %s20, 0
      %p54 = por %p52, %p53
      %p55 = scmp.ne.s32.totalorder %s44, %s47
      %p56 = scmp.eq.s32.totalorder %s25, 1
      %p57 = por %p55, %p56
      %p58 = scmp.ne.s32.totalorder %s47, %s48
      %p59 = scmp.eq.s32.totalorder %s25, 0
      %p60 = por %p58, %p59
      %p61 = scmp.ne.s32.totalorder %s47, %s48
      %p62 = scmp.eq.s32.totalorder %s26, 1
      %p63 = por %p61, %p62
      %p65 = scmp.ne.s32.totalorder %s48, %s64
      %p66 = scmp.eq.s32.totalorder %s26, 0
      %p67 = por %p65, %p66
      %s68 = ssub.s32 %s27, %s39
      %p69 = scmp.eq.s32.totalorder %s68, 0
      %s71 = sadd.s32 %s70, 1
      %s72 = scalar_select %p69, %s70, %s71
      %p75 = pneg %p69
      %p76 = scmp.eq.s32.totalorder %s20, 1
      %p77 = por %p75, %p76
      %p78 = scmp.ne.s32.totalorder %s70, %s73
      %p79 = scmp.eq.s32.totalorder %s20, 0
      %p80 = por %p78, %p79
      %p81 = scmp.ne.s32.totalorder %s70, %s73
      %p82 = scmp.eq.s32.totalorder %s25, 1
      %p83 = por %p81, %p82
      %p84 = scmp.ne.s32.totalorder %s73, %s74
      %p85 = scmp.eq.s32.totalorder %s25, 0
      %p86 = por %p84, %p85
      %p87 = scmp.ne.s32.totalorder %s73, %s74
      %p88 = scmp.eq.s32.totalorder %s26, 1
      %p89 = por %p87, %p88
      %p91 = scmp.ne.s32.totalorder %s74, %s90
      %p92 = scmp.eq.s32.totalorder %s26, 0
      %p93 = por %p91, %p92
      %s94 = ssub.s32 %s27, %s39
      %p95 = scmp.eq.s32.totalorder %s94, 0
      %s97 = sadd.s32 %s96, 1
      %s98 = scalar_select %p95, %s96, %s97
      %p101 = pneg %p95
      %p102 = scmp.eq.s32.totalorder %s20, 1
      %p103 = por %p101, %p102
      %p104 = scmp.ne.s32.totalorder %s96, %s99
      %p105 = scmp.eq.s32.totalorder %s20, 0
      %p106 = por %p104, %p105
      %p107 = scmp.ne.s32.totalorder %s96, %s99
      %p108 = scmp.eq.s32.totalorder %s25, 1
      %p109 = por %p107, %p108
      %p110 = scmp.ne.s32.totalorder %s99, %s100
      %p111 = scmp.eq.s32.totalorder %s25, 0
      %p112 = por %p110, %p111
      %p113 = scmp.ne.s32.totalorder %s99, %s100
      %p114 = scmp.eq.s32.totalorder %s26, 1
      %p115 = por %p113, %p114
      %p117 = scmp.ne.s32.totalorder %s100, %s116
      %p118 = scmp.eq.s32.totalorder %s26, 0
      %p119 = por %p117, %p118
      %s121 = sadd.s32 %s120, 1
      %p124 = scmp.eq.s32.totalorder %s20, 1
      %p125 = scmp.ne.s32.totalorder %s120, %s122
      %p126 = scmp.eq.s32.totalorder %s20, 0
      %p127 = por %p125, %p126
      %p128 = scmp.ne.s32.totalorder %s120, %s122
      %p129 = scmp.eq.s32.totalorder %s25, 1
      %p130 = por %p128, %p129
      %p131 = scmp.ne.s32.totalorder %s122, %s123
      %p132 = scmp.eq.s32.totalorder %s25, 0
      %p133 = por %p131, %p132
      %p134 = scmp.ne.s32.totalorder %s122, %s123
      %p135 = scmp.eq.s32.totalorder %s26, 1
      %p136 = por %p134, %p135
      %p138 = scmp.ne.s32.totalorder %s123, %s137
      %p139 = scmp.eq.s32.totalorder %s26, 0
      %p140 = por %p138, %p139
      %s142 = sadd.s32 %s141, 1
      %p145 = scmp.eq.s32.totalorder %s20, 1
      %p146 = scmp.ne.s32.totalorder %s141, %s143
      %p147 = scmp.eq.s32.totalorder %s20, 0
      %p148 = por %p146, %p147
      %p149 = scmp.ne.s32.totalorder %s141, %s143
      %p150 = scmp.eq.s32.totalorder %s25, 1
      %p151 = por %p149, %p150
      %p152 = scmp.ne.s32.totalorder %s143, %s144
      %p153 = scmp.eq.s32.totalorder %s25, 0
      %p154 = por %p152, %p153
      %p155 = scmp.ne.s32.totalorder %s143, %s144
      %p156 = scmp.eq.s32.totalorder %s26, 1
      %p157 = por %p155, %p156
      %p159 = scmp.ne.s32.totalorder %s144, %s158
      %p160 = scmp.eq.s32.totalorder %s26, 0
      %p161 = por %p159, %p160
      %s163 = sadd.s32 %s162, 1
      %p166 = scmp.eq.s32.totalorder %s20, 1
      %p167 = scmp.ne.s32.totalorder %s162, %s164
      %p168 = scmp.eq.s32.totalorder %s20, 0
      %p169 = por %p167, %p168
      %p170 = scmp.ne.s32.totalorder %s162, %s164
      %p171 = scmp.eq.s32.totalorder %s25, 1
      %p172 = por %p170, %p171
      %p173 = scmp.ne.s32.totalorder %s164, %s165
      %p174 = scmp.eq.s32.totalorder %s25, 0
      %p175 = por %p173, %p174
      %p176 = scmp.ne.s32.totalorder %s164, %s165
      %p177 = scmp.eq.s32.totalorder %s26, 1
      %p178 = por %p176, %p177
      %p180 = scmp.ne.s32.totalorder %s165, %s179
      %p181 = scmp.eq.s32.totalorder %s26, 0
      %p182 = por %p180, %p181
      %s184 = sadd.s32 %s183, 1
      %p187 = scmp.eq.s32.totalorder %s20, 1
      %p188 = scmp.ne.s32.totalorder %s183, %s185
      %p189 = scmp.eq.s32.totalorder %s20, 0
      %p190 = por %p188, %p189
      %p191 = scmp.ne.s32.totalorder %s183, %s185
      %p192 = scmp.eq.s32.totalorder %s25, 1
      %p193 = por %p191, %p192
      %p194 = scmp.ne.s32.totalorder %s185, %s186
      %p195 = scmp.eq.s32.totalorder %s25, 0
      %p196 = por %p194, %p195
      %p197 = scmp.ne.s32.totalorder %s185, %s186
      %p198 = scmp.eq.s32.totalorder %s26, 1
      %p199 = por %p197, %p198
      %p201 = scmp.ne.s32.totalorder %s186, %s200
      %p202 = scmp.eq.s32.totalorder %s26, 0
      %p203 = por %p201, %p202
      %s205 = sadd.s32 %s204, 1
      %p208 = scmp.eq.s32.totalorder %s20, 1
      %p209 = scmp.ne.s32.totalorder %s204, %s206
      %p210 = scmp.eq.s32.totalorder %s20, 0
      %p211 = por %p209, %p210
      %p212 = scmp.ne.s32.totalorder %s204, %s206
      %p213 = scmp.eq.s32.totalorder %s25, 1
      %p214 = por %p212, %p213
      %p215 = scmp.ne.s32.totalorder %s206, %s207
      %p216 = scmp.eq.s32.totalorder %s25, 0
      %p217 = por %p215, %p216
      %p218 = scmp.ne.s32.totalorder %s206, %s207
      %p219 = scmp.eq.s32.totalorder %s26, 1
      %p220 = por %p218, %p219
      %p222 = scmp.ne.s32.totalorder %s207, %s221
      %p223 = scmp.eq.s32.totalorder %s26, 0
      %p224 = por %p222, %p223
      %s226 = sadd.s32 %s225, 1
      %p229 = scmp.eq.s32.totalorder %s20, 1
      %p230 = scmp.ne.s32.totalorder %s225, %s227
      %p231 = scmp.eq.s32.totalorder %s20, 0
      %p232 = por %p230, %p231
      %p233 = scmp.ne.s32.totalorder %s225, %s227
      %p234 = scmp.eq.s32.totalorder %s25, 1
      %p235 = por %p233, %p234
      %p236 = scmp.ne.s32.totalorder %s227, %s228
      %p237 = scmp.eq.s32.totalorder %s25, 0
      %p238 = por %p236, %p237
      %p239 = scmp.ne.s32.totalorder %s227, %s228
      %p240 = scmp.eq.s32.totalorder %s26, 1
      %p241 = por %p239, %p240
      %p243 = scmp.ne.s32.totalorder %s228, %s242
      %p244 = scmp.eq.s32.totalorder %s26, 0
      %p245 = por %p243, %p244
      %s247 = sadd.s32 %s246, 1
      %p250 = scmp.eq.s32.totalorder %s20, 1
      %p251 = scmp.ne.s32.totalorder %s246, %s248
      %p252 = scmp.eq.s32.totalorder %s20, 0
      %p253 = por %p251, %p252
      %p254 = scmp.ne.s32.totalorder %s246, %s248
      %p255 = scmp.eq.s32.totalorder %s25, 1
      %p256 = por %p254, %p255
      %p257 = scmp.ne.s32.totalorder %s248, %s249
      %p258 = scmp.eq.s32.totalorder %s25, 0
      %p259 = por %p257, %p258
      %p260 = scmp.ne.s32.totalorder %s248, %s249
      %p261 = scmp.eq.s32.totalorder %s26, 1
      %p262 = por %p260, %p261
      %p264 = scmp.ne.s32.totalorder %s249, %s263
      %p265 = scmp.eq.s32.totalorder %s26, 0
      %p266 = por %p264, %p265
      %s267 = ssub.s32 %s27, %s39
      %s268 = ssub.s32 %s28, %s35
      %s269 = sor.u32 %s267, %s268
      %p270 = scmp.eq.s32.totalorder %s269, 0
      %s272 = sadd.s32 %s271, 1
      %s273 = scalar_select %p270, %s271, %s272
      %p276 = pneg %p270
      %p277 = scmp.eq.s32.totalorder %s20, 1
      %p278 = por %p276, %p277
      %p279 = scmp.ne.s32.totalorder %s271, %s274
      %p280 = scmp.eq.s32.totalorder %s20, 0
      %p281 = por %p279, %p280
      %p282 = scmp.ne.s32.totalorder %s271, %s274
      %p283 = scmp.eq.s32.totalorder %s25, 1
      %p284 = por %p282, %p283
      %p285 = scmp.ne.s32.totalorder %s274, %s275
      %p286 = scmp.eq.s32.totalorder %s25, 0
      %p287 = por %p285, %p286
      %p288 = scmp.ne.s32.totalorder %s274, %s275
      %p289 = scmp.eq.s32.totalorder %s26, 1
      %p290 = por %p288, %p289
      %p292 = scmp.ne.s32.totalorder %s275, %s291
      %p293 = scmp.eq.s32.totalorder %s26, 0
      %p294 = por %p292, %p293
      %p295 = scmp.le.s32.totalorder 1, %s20
      %p296 = scmp.lt.s32.totalorder %s20, 3
      %p297 = pnand %p295, %p296
      %p298 = pneg %p297
      // Predicated region
      $region9: #{tpu_custom_call.1} parent=5 // pred_check
        _
      $region10: #{tpu_custom_call.1} parent=5 // pred_check_branch
        %300 = sbr.rel (%p297) target = $region12
      $region11: #{tpu_custom_call.1} parent=5 // pred_region
        %s301 = ssub.s32 %s20, 1
        // Predicated region
        $region13: #{tpu_custom_call.1} parent=11 // pred_check
          %p302 = pneg %p133
        $region14: #{tpu_custom_call.1} parent=11 // pred_check_branch
          %304 = sbr.rel (%p302) target = $region16
        $region15: #{tpu_custom_call.1} parent=11 // pred_region
          _
        $region16: #{tpu_custom_call.1} parent=11 // pred_fallthru
          _
        // Predicated region
        $region17: #{tpu_custom_call.1} parent=11 // pred_check
          %p305 = pneg %p154
        $region18: #{tpu_custom_call.1} parent=11 // pred_check_branch
          %307 = sbr.rel (%p305) target = $region20
        $region19: #{tpu_custom_call.1} parent=11 // pred_region
          _
        $region20: #{tpu_custom_call.1} parent=11 // pred_fallthru
          _
        // Predicated region
        $region21: #{tpu_custom_call.1} parent=11 // pred_check
          %p308 = pneg %p175
        $region22: #{tpu_custom_call.1} parent=11 // pred_check_branch
          %310 = sbr.rel (%p308) target = $region24
        $region23: #{tpu_custom_call.1} parent=11 // pred_region
          _
        $region24: #{tpu_custom_call.1} parent=11 // pred_fallthru
          _
        // Predicated region
        $region25: #{tpu_custom_call.1} parent=11 // pred_check
          %p311 = pneg %p196
        $region26: #{tpu_custom_call.1} parent=11 // pred_check_branch
          %313 = sbr.rel (%p311) target = $region28
        $region27: #{tpu_custom_call.1} parent=11 // pred_region
          _
        $region28: #{tpu_custom_call.1} parent=11 // pred_fallthru
          _
        // Predicated region
        $region29: #{tpu_custom_call.1} parent=11 // pred_check
          %p314 = pneg %p217
        $region30: #{tpu_custom_call.1} parent=11 // pred_check_branch
          %316 = sbr.rel (%p314) target = $region32
        $region31: #{tpu_custom_call.1} parent=11 // pred_region
          _
        $region32: #{tpu_custom_call.1} parent=11 // pred_fallthru
          _
        // Predicated region
        $region33: #{tpu_custom_call.1} parent=11 // pred_check
          %p317 = pneg %p238
        $region34: #{tpu_custom_call.1} parent=11 // pred_check_branch
          %319 = sbr.rel (%p317) target = $region36
        $region35: #{tpu_custom_call.1} parent=11 // pred_region
          _
        $region36: #{tpu_custom_call.1} parent=11 // pred_fallthru
          _
        // Predicated region
        $region37: #{tpu_custom_call.1} parent=11 // pred_check
          %p320 = pneg %p259
        $region38: #{tpu_custom_call.1} parent=11 // pred_check_branch
          %322 = sbr.rel (%p320) target = $region40
        $region39: #{tpu_custom_call.1} parent=11 // pred_region
          _
        $region40: #{tpu_custom_call.1} parent=11 // pred_fallthru
          _
      $region12: #{tpu_custom_call.1} parent=5 // pred_fallthru
        _
      %p323 = scmp.lt.s32.totalorder %s20, 2
      // Predicated region
      $region41: #{tpu_custom_call.1} parent=5 // pred_check
        %p324 = pneg %p323
      $region42: #{tpu_custom_call.1} parent=5 // pred_check_branch
        %326 = sbr.rel (%p324) target = $region44
      $region43: #{tpu_custom_call.1} parent=5 // pred_region
        // Predicated region
        $region45: #{tpu_custom_call.1} parent=43 // pred_check
          %p327 = pneg %p54
        $region46: #{tpu_custom_call.1} parent=43 // pred_check_branch
          %329 = sbr.rel (%p327) target = $region48
        $region47: #{tpu_custom_call.1} parent=43 // pred_region
          %p330 = scmp.lt.s32.totalorder %s27, 1
          %s331 = scalar_select %p330, %s27, 1
          %p332 = scmp.lt.s32.totalorder %s28, 0
          %s333 = scalar_select %p332, %s28, 0
          %s334 = smul.addr %s331, 2
          %s335 = sadd.s32 %s333, %s334
          %s336 = smul.addr %s335, 8
          %s337 = scalar_lea.vmem %s0, %s336
        $region48: #{tpu_custom_call.1} parent=43 // pred_fallthru
          _
        // Predicated region
        $region49: #{tpu_custom_call.1} parent=43 // pred_check
          %p338 = pneg %p80
        $region50: #{tpu_custom_call.1} parent=43 // pred_check_branch
          %340 = sbr.rel (%p338) target = $region52
        $region51: #{tpu_custom_call.1} parent=43 // pred_region
          %p341 = scmp.lt.s32.totalorder %s27, 1
          %s342 = scalar_select %p341, %s27, 1
          %s343 = smul.addr %s342, 8
          %s344 = scalar_lea.vmem %s1, %s343
        $region52: #{tpu_custom_call.1} parent=43 // pred_fallthru
          _
        // Predicated region
        $region53: #{tpu_custom_call.1} parent=43 // pred_check
          %p345 = pneg %p106
        $region54: #{tpu_custom_call.1} parent=43 // pred_check_branch
          %347 = sbr.rel (%p345) target = $region56
        $region55: #{tpu_custom_call.1} parent=43 // pred_region
          %p348 = scmp.lt.s32.totalorder %s27, 1
          %s349 = scalar_select %p348, %s27, 1
          %s350 = smul.addr %s349, 2
          %s351 = smul.addr %s350, 8
          %s352 = scalar_lea.vmem %s2, %s351
        $region56: #{tpu_custom_call.1} parent=43 // pred_fallthru
          _
      $region44: #{tpu_custom_call.1} parent=5 // pred_fallthru
        _
      %p353 = scmp.le.s32.totalorder 1, %s20
      %p354 = scmp.lt.s32.totalorder %s20, 3
      %p355 = pnand %p353, %p354
      %p356 = pneg %p355
      // Predicated region
      $region57: #{tpu_custom_call.1} parent=5 // pred_check
        _
      $region58: #{tpu_custom_call.1} parent=5 // pred_check_branch
        %358 = sbr.rel (%p355) target = $region60
      $region59: #{tpu_custom_call.1} parent=5 // pred_region
        %s359 = ssub.s32 %s20, 1
        %p360 = scmp.lt.s32.totalorder %s29, 1
        %s361 = scalar_select %p360, %s29, 1
        %p362 = scmp.lt.s32.totalorder %s30, 0
        %s363 = scalar_select %p362, %s30, 0
        %s364 = smul.addr %s361, 2
        %s365 = sadd.s32 %s363, %s364
        %s366 = smul.addr %s365, 8
        %s367 = scalar_lea.vmem %s0, %s366
        %p368 = pneg %p60
        %p369 = pneg %p57
        %p370 = scmp.lt.s32.totalorder %s29, 1
        %s371 = scalar_select %p370, %s29, 1
        %s372 = smul.addr %s371, 8
        %s373 = scalar_lea.vmem %s1, %s372
        %p374 = pneg %p86
        %p375 = pneg %p83
        %p376 = scmp.lt.s32.totalorder %s29, 1
        %s377 = scalar_select %p376, %s29, 1
        %s378 = smul.addr %s377, 2
        %s379 = smul.addr %s378, 8
        %s380 = scalar_lea.vmem %s2, %s379
        %p381 = pneg %p112
        %p382 = pneg %p109
        %p383 = pneg %p133
        %p384 = pneg %p130
        %p385 = pneg %p154
        %p386 = pneg %p151
        %p387 = pneg %p175
        %p388 = pneg %p172
        %p389 = pneg %p196
        %p390 = pneg %p193
        %p391 = pneg %p217
        %p392 = pneg %p214
        %p393 = pneg %p238
        %p394 = pneg %p235
        %p395 = pneg %p259
        %p396 = pneg %p256
        %p397 = pneg %p287
        %p398 = pneg %p284
        %s399 = sand.u32 %s274, 1
        %s400 = scalar_lea.sflag [#allocation4], %s399
        %s401 = sand.u32 %s274, 1
        %s402 = smul.addr %s401, 16
        %s403 = scalar_lea.vmem [#allocation3], %s402
        %p404 = scmp.lt.s32.totalorder %s29, 1
        %s405 = scalar_select %p404, %s29, 1
        %p406 = scmp.lt.s32.totalorder %s30, 0
        %s407 = scalar_select %p406, %s30, 0
        %s408 = smul.addr %s405, 2
        %s409 = sadd.s32 %s407, %s408
        %s410 = smul.addr %s409, 8
        %s411 = scalar_lea.vmem %s0, %s410
        %p412 = scmp.lt.s32.totalorder %s29, 1
        %s413 = scalar_select %p412, %s29, 1
        %s414 = smul.addr %s413, 8
        %s415 = scalar_lea.vmem %s1, %s414
        %p416 = scmp.lt.s32.totalorder %s29, 1
        %s417 = scalar_select %p416, %s29, 1
        %s418 = smul.addr %s417, 2
        %s419 = smul.addr %s418, 8
        %s420 = scalar_lea.vmem %s2, %s419
        %v421 = vld [vmem:[%s411] sm:$0xff]
        %v422 = vld [vmem:[%s411 + $0x8] sm:$0xff]
        %v423 = vld [vmem:[%s415] sm:$0xff]
        %v424 = vld [vmem:[%s420] sm:$0xff]
        %v425 = vld [vmem:[%s420 + $0x8] sm:$0xff]
        %v426 = vld [vmem:[%s3] sm:$0xf]
        %v427 = vld [vmem:[%s4] sm:$0xf]
        %429 = vset.pattern.permute.xlu0 0
        %430 = vperm.xlu0 %429, %v427
        %v431 = vpop.permute.xlu0 %430
        %vm433 = vcmask 130048
        %v435 = vsel %vm433, %v426, 0
        %437 = vmatpush.msra.mxu0 0.0
        %438 = vmatpush.msra.mxu0 0.0
        %439 = vmatpush.msra.mxu0 0.0
        %440 = vmatpush.msra.mxu0 0.0
        %441 = vmatpush.msra.mxu0 0.0
        %442 = vmatpush.msra.mxu0 0.0
        %443 = vmatpush.msra.mxu0 0.0
        %444 = vmatpush.msra.mxu0 0.0
        %445 = vmatpush.msra.mxu0 0.0
        %446 = vmatpush.msra.mxu0 0.0
        %447 = vmatpush.msra.mxu0 0.0
        %448 = vmatpush.msra.mxu0 0.0
        %449 = vmatpush.msra.mxu0 0.0
        %450 = vmatpush.msra.mxu0 0.0
        %451 = vmatpush.msra.mxu0 %v422
        %452 = vmatpush.msra.mxu0 %v421
        %453 = vmatmul.f32.gmra.mxu0 %v435
        %v454 = vpop.f32.mrf.mxu0
        %v455 = vadd.f32 %v431, %v454
        %456 = vdwg.mxu0
        %v457 = vld [vmem:[%s5] sm:$0xff]
        %v458 = vld [vmem:[%s5 + $0x8] sm:$0xff]
        %v459 = vld [vmem:[%s6] sm:$0x1]
        %v461 = vperm.slane %v459, 0
        %v464 = vsel %vm433, %v423, 0
        %466 = vmatpush.msra.mxu0 0.0
        %467 = vmatpush.msra.mxu0 0.0
        %468 = vmatpush.msra.mxu0 0.0
        %469 = vmatpush.msra.mxu0 0.0
        %470 = vmatpush.msra.mxu0 0.0
        %471 = vmatpush.msra.mxu0 0.0
        %472 = vmatpush.msra.mxu0 0.0
        %473 = vmatpush.msra.mxu0 0.0
        %474 = vmatpush.msra.mxu0 0.0
        %475 = vmatpush.msra.mxu0 0.0
        %476 = vmatpush.msra.mxu0 0.0
        %477 = vmatpush.msra.mxu0 0.0
        %478 = vmatpush.msra.mxu0 0.0
        %479 = vmatpush.msra.mxu0 0.0
        %480 = vmatpush.msra.mxu0 %v458
        %481 = vmatpush.msra.mxu0 %v457
        %482 = vmatmul.f32.gmra.mxu0 %v464
        %v483 = vpop.f32.mrf.mxu0
        %v484 = vadd.f32 %v461, %v483
        %485 = vdwg.mxu0
        %v486 = vld [vmem:[%s7] sm:$0xff]
        %v487 = vld [vmem:[%s7 + $0x8] sm:$0xff]
        %v488 = vld [vmem:[%s8] sm:$0xff]
        %v489 = vld [vmem:[%s8 + $0x8] sm:$0xff]
        %491 = vset.pattern.permute.xlu0 0
        %492 = vperm.xlu0 %491, %v488
        %v493 = vpop.permute.xlu0 %492
        %496 = vset.pattern.permute.xlu0 0
        %497 = vperm.xlu0 %496, %v489
        %v498 = vpop.permute.xlu0 %497
        %v501 = vsel %vm433, %v486, 0
        %v504 = vsel %vm433, %v487, 0
        %506 = vmatpush.msra.mxu0 0.0
        %507 = vmatpush.msra.mxu0 0.0
        %508 = vmatpush.msra.mxu0 0.0
        %509 = vmatpush.msra.mxu0 0.0
        %510 = vmatpush.msra.mxu0 0.0
        %511 = vmatpush.msra.mxu0 0.0
        %512 = vmatpush.msra.mxu0 0.0
        %513 = vmatpush.msra.mxu0 0.0
        %514 = vmatpush.msra.mxu0 0.0
        %515 = vmatpush.msra.mxu0 0.0
        %516 = vmatpush.msra.mxu0 0.0
        %517 = vmatpush.msra.mxu0 0.0
        %518 = vmatpush.msra.mxu0 0.0
        %519 = vmatpush.msra.mxu0 0.0
        %520 = vmatpush.msra.mxu0 %v425
        %521 = vmatpush.msra.mxu0 %v424
        %522 = vmatmul.f32.gmra.mxu0 %v501
        %v523 = vpop.f32.mrf.mxu0
        %v524 = vadd.f32 %v493, %v523
        %525 = vmatmul.f32.gmra.mxu0 %v504
        %v526 = vpop.f32.mrf.mxu0
        %v527 = vadd.f32 %v498, %v526
        %528 = vdwg.mxu0
        %vm529 = vcmask 31744
        %v531 = vsel %vm529, %v484, 0
        %vm533 = vcmask 1043456
        %v535 = vsel %vm533, %v455, 0
        %537 = vmatpush.msra.mxu0 0.0
        %538 = vmatpush.msra.mxu0 0.0
        %539 = vmatpush.msra.mxu0 0.0
        %540 = vmatpush.msra.mxu0 0.0
        %541 = vmatpush.msra.mxu0 0.0
        %542 = vmatpush.msra.mxu0 0.0
        %543 = vmatpush.msra.mxu0 0.0
        %544 = vmatpush.msra.mxu0 0.0
        %545 = vmatpush.msra.mxu0 0.0
        %546 = vmatpush.msra.mxu0 0.0
        %547 = vmatpush.msra.mxu0 0.0
        %548 = vmatpush.msra.mxu0 0.0
        %549 = vmatpush.msra.mxu0 0.0
        %550 = vmatpush.msra.mxu0 0.0
        %551 = vmatpush.msra.mxu0 0.0
        %552 = vmatpush.msra.mxu0 %v535
        %553 = vmatmul.f32.gmra.mxu0 %v531
        %v554 = vpop.f32.mrf.mxu0
        %v555 = vadd.f32 0.0, %v554
        %556 = vdwg.mxu0
        %vm557 = vcmask 523264
        %v558 = vsel %vm557, %v555, -inf
        %v559 = vrot.slane %v558, 4
        %v560 = vmax.f32 %v558, %v559
        %v561 = vrot.slane %v560, 2
        %v562 = vmax.f32 %v560, %v561
        %v563 = vrot.slane %v562, 1
        %v564 = vmax.f32 %v562, %v563
        %v565 = vsub.f32 %v555, %v564
        %v566 = vmul.f32 %v565, 1.442695
        %v567 = vpow.pop %v566
        %v568 = vsel %vm557, %v567, 0.0
        %v569 = vrot.slane %v568, 4
        %v570 = vadd.f32 %v568, %v569
        %v571 = vrot.slane %v570, 2
        %v572 = vadd.f32 %v570, %v571
        %v573 = vrot.slane %v572, 1
        %v574 = vadd.f32 %v572, %v573
        %v575 = vrcp.pop %v574
        %v576 = vmul.f32 %v574, %v575
        %v577 = vsub.f32 1.0, %v576
        %v578 = vmul.f32 %v575, %v577
        %v579 = vadd.f32 %v575, %v578
        %vm580 = vweird.f32 %v574
        %vm581 = vweird.f32 %v575
        %vm582 = vmor %vm580, %vm581
        %v583 = vsel %vm582, %v575, %v579
        %v584 = vand.u32 2147483647, %v574
        %vm585 = vcmp.eq.f32.partialorder %v584, 8.507059e+37
        %v586 = vand.u32 %v574, 2147483648
        %v587 = vor.u32 1.1754944e-38, %v586
        %v588 = vsel %vm585, %v587, %v583
        %v589 = vmul.f32 %v567, %v588
        %vm590 = vcmask 64512
        %v592 = vsel %vm590, %v524, 0
        %v595 = vsel %vm590, %v527, 0
        %597 = vmatpush.msra.mxu0 0.0
        %598 = vmatpush.msra.mxu0 0.0
        %599 = vmatpush.msra.mxu0 0.0
        %600 = vmatpush.msra.mxu0 0.0
        %601 = vmatpush.msra.mxu0 0.0
        %602 = vmatpush.msra.mxu0 0.0
        %603 = vmatpush.msra.mxu0 0.0
        %604 = vmatpush.msra.mxu0 0.0
        %605 = vmatpush.msra.mxu0 0.0
        %606 = vmatpush.msra.mxu0 0.0
        %607 = vmatpush.msra.mxu0 0.0
        %608 = vmatpush.msra.mxu0 0.0
        %609 = vmatpush.msra.mxu0 0.0
        %610 = vmatpush.msra.mxu0 0.0
        %611 = vmatpush.msra.mxu0 0.0
        %612 = vmatpush.msra.mxu0 %v589
        %613 = vmatmul.f32.gmra.mxu0 %v592
        %v614 = vpop.f32.mrf.mxu0
        %v615 = vadd.f32 0.0, %v614
        %616 = vmatmul.f32.gmra.mxu0 %v595
        %v617 = vpop.f32.mrf.mxu0
        %v618 = vadd.f32 0.0, %v617
        %619 = vdwg.mxu0
        %s620 = sld [smem:[#allocation2]]
        %v621 = vstv %s620
        %v622 = vmul.f32 %v621, %v615
        %v623 = vmul.f32 %v621, %v618
        %v624 = vadd.f32 %v622, %v421
        %v625 = vadd.f32 %v623, %v422
        %626 = vst.msk [vmem:[%s403] sm:$0xff] %vm557, %v624
        %627 = vst.msk [vmem:[%s403 + $0x8] sm:$0xff] %vm557, %v625
        %s628 = sand.u32 %s274, 1
        %s629 = scalar_lea.sflag [#allocation4], %s628
        %s630 = sand.u32 %s274, 1
        %s631 = smul.addr %s630, 16
        %s632 = scalar_lea.vmem [#allocation3], %s631
        // Predicated region
        $region61: #{tpu_custom_call.1} parent=59 // pred_check
          %p633 = pneg %p284
        $region62: #{tpu_custom_call.1} parent=59 // pred_check_branch
          %635 = sbr.rel (%p633) target = $region64
        $region63: #{tpu_custom_call.1} parent=59 // pred_region
          %637 = vsyncadd %s629, 0
          %s638 = smul.addr %s29, 2
          %s639 = sadd.s32 %s30, %s638
          %s640 = smul.addr %s639, 8
          %s641 = scalar_lea.hbm %s10, %s640
          %s642 = sshll.u32 %s632, 4
          %s643 = int_to_ptr.vmem [resolvable:$true] %s642
          %s644 = sshll.u32 %s641, 4
          %s645 = int_to_ptr.hbm [resolvable:$true] %s644
          %650 = dma.vmem_to_hbm [thread:$0]  %s643, 256, %s645, %s629, 128, 128, 8
        $region64: #{tpu_custom_call.1} parent=59 // pred_fallthru
          _
      $region60: #{tpu_custom_call.1} parent=5 // pred_fallthru
        _
      %p651 = scmp.le.s32.totalorder 2, %s20
      // Predicated region
      $region65: #{tpu_custom_call.1} parent=5 // pred_check
        %p652 = pneg %p651
      $region66: #{tpu_custom_call.1} parent=5 // pred_check_branch
        %654 = sbr.rel (%p652) target = $region68
      $region67: #{tpu_custom_call.1} parent=5 // pred_region
        %s655 = ssub.s32 %s20, 2
        // Predicated region
        $region69: #{tpu_custom_call.1} parent=67 // pred_check
          %p656 = pneg %p290
        $region70: #{tpu_custom_call.1} parent=67 // pred_check_branch
          %658 = sbr.rel (%p656) target = $region72
        $region71: #{tpu_custom_call.1} parent=67 // pred_region
          %s659 = sand.u32 %s275, 1
          %s660 = scalar_lea.sflag [#allocation4], %s659
          %s661 = sand.u32 %s275, 1
          %s662 = smul.addr %s661, 16
          %s663 = scalar_lea.vmem [#allocation3], %s662
          %665 = dma.done %s660, 256
        $region72: #{tpu_custom_call.1} parent=67 // pred_fallthru
          _
      $region68: #{tpu_custom_call.1} parent=5 // pred_fallthru
        _
    $region6: #{tpu_custom_call.1} parent=1 // loop_footer
      %s24 = sadd.s32 1, %s20
    $region7: #{tpu_custom_call.1} parent=1 // loop_footer_branch
      %19 = sbr.rel target = $region3
    $region8: #{tpu_custom_call.1} parent=1 // loop_exit
      _
    %666 = vsyncpa [#allocation4], 1
    %s667 = scalar_lea.sflag [#allocation4], 1
    %668 = vsyncpa %s667, 1

</llo_original>
